<compile_context>
chip_gen: v7x
topology: tpu7x:2x2x1
jax: 0.10.0
libtpu: 0.0.40
codegen_flags: <defaults>
</compile_context>

<pallas_src>
import functools

import jax
import jax.numpy as jnp
from jax.experimental import pallas as pl
from jax.experimental.pallas import tpu as pltpu

LANE = 128         # last-dim tile width
SUBLANE_BF16 = 16  # bf16 sublane pack (MXU operand is bf16 in-kernel)


def _round_up(n, m):
    return ((n + m - 1) // m) * m


# ---------------------------------------------------------------------------
# Parameter construction (mirrors Dense.__init__ layer-size schedule).
# ---------------------------------------------------------------------------
def _layer_sizes(input_size, output_size, n_layers):
    ratio = output_size / input_size
    sizes = []
    fin = input_size
    for i in range(n_layers):
        nxt = int(input_size * ratio ** ((i + 1) / n_layers))
        if i == n_layers - 1:
            nxt = output_size
        sizes.append((fin, nxt))
        fin = nxt
    return sizes


def make_dense_params(key, input_size, output_size, n_layers):
    params = []
    for (fin, fout) in _layer_sizes(input_size, output_size, n_layers):
        key, k1, k2, k3, k4 = jax.random.split(key, 5)
        bound = 1.0 / (fin ** 0.5)  # torch.nn.Linear default init scale
        w = jax.random.uniform(k1, (fin, fout), jnp.float32, -bound, bound)
        b = jax.random.uniform(k2, (1, fout), jnp.float32, -bound, bound)
        wg = jax.random.uniform(k3, (fin, fout), jnp.float32, -bound, bound)
        bg = jax.random.uniform(k4, (1, fout), jnp.float32, -bound, bound)
        params.append((w, b, wg, bg))
    return params


# ---------------------------------------------------------------------------
# ONE-TIME pre-packing (setup-time, NOT in the per-call path).
# ---------------------------------------------------------------------------
def pack_dense_params(params):
    """Pad every layer to a common (D_pad, 2*D_pad) bf16 tile and stack.

    Returns (wc_stack, bc_stack, fout_last):
      wc_stack : (L, D_pad, 2*D_pad) bf16   -- [W | G] per layer (zero-padded)
      bc_stack : (L, 1,     2*D_pad) f32    -- [b | c] per layer (zero-padded)
    """
    sizes = [(w.shape[0], w.shape[1]) for (w, _, _, _) in params]
    d_pad = _round_up(max(max(fin, fout) for fin, fout in sizes), LANE)

    wcs, bcs = [], []
    for (w, b, wg, bg) in params:
        fin, fout = w.shape
        wc = jnp.zeros((d_pad, 2 * d_pad), jnp.float32)
        wc = wc.at[:fin, :fout].set(w)
        wc = wc.at[:fin, d_pad:d_pad + fout].set(wg)
        bc = jnp.zeros((1, 2 * d_pad), jnp.float32)
        bc = bc.at[:, :fout].set(b)
        bc = bc.at[:, d_pad:d_pad + fout].set(bg)
        wcs.append(wc.astype(jnp.bfloat16))
        bcs.append(bc)

    wc_stack = jnp.stack(wcs)   # (L, D_pad, 2*D_pad) bf16
    bc_stack = jnp.stack(bcs)   # (L, 1, 2*D_pad)     f32
    return wc_stack, bc_stack, sizes[-1][1]


# ---------------------------------------------------------------------------
# Kernel: one grid step = one (batch tile, layer) pair.
# ---------------------------------------------------------------------------
def _dense_kernel(x_ref, wc_ref, bc_ref, o_ref, act_ref, *, d_pad):
    l = pl.program_id(1)

    @pl.when(l == 0)
    def _():
        # Load the (padded) input activation for this batch tile.
        act_ref[...] = x_ref[...]

    x = act_ref[...]                                   # f32 (tb, D_pad)
    # One MXU dot covers both the linear and the gate projection.
    r = jnp.dot(x.astype(jnp.bfloat16), wc_ref[0],
                preferred_element_type=jnp.float32) + bc_ref[0]
    v1 = r[:, :d_pad]                                  # lane-aligned split
    gate = jax.nn.sigmoid(r[:, d_pad:])                # f32 EUP epilogue
    act_ref[...] = v1 * gate

    @pl.when(l == pl.num_programs(1) - 1)
    def _():
        o_ref[...] = act_ref[...]


# ---------------------------------------------------------------------------
# Wrapper: pad activation only, single layer-streamed pallas_call, strip pad.
# ---------------------------------------------------------------------------
def dense_forward(x, packed):
    wc_stack, bc_stack, fout_last = packed
    n_layers, d_pad, two_d = wc_stack.shape
    B, f0 = x.shape

    # Batch padded to bf16 sublane pack; 256-row tiles for big batches so the
    # "parallel" batch axis can shard across v7x's two TensorCores.
    b16 = _round_up(B, SUBLANE_BF16)
    tb = min(256, b16)
    b_pad = _round_up(b16, tb)
    n_btiles = b_pad // tb

    x_p = jnp.zeros((b_pad, d_pad), jnp.float32).at[:B, :f0].set(x)

    # Advisory cost estimate for XLA scheduling around the custom call.
    flops = n_btiles * n_layers * (2 * tb * d_pad * two_d + 4 * tb * d_pad)
    transcendentals = n_btiles * n_layers * tb * d_pad
    bytes_accessed = (n_btiles * (int(wc_stack.size) * 2 + int(bc_stack.size) * 4)
                      + int(x_p.size) * 4 + b_pad * d_pad * 4)

    # Explicit VMEM budget: double-buffered in/out blocks + scratch + f32 temp.
    wc_blk = d_pad * two_d * 2          # bf16 weight block
    bc_blk = two_d * 4
    x_blk = tb * d_pad * 4
    o_blk = tb * d_pad * 4
    scratch_b = tb * d_pad * 4
    temp_b = tb * two_d * 4             # r (f32) live value
    footprint = 2 * (wc_blk + bc_blk + x_blk + o_blk) + scratch_b + temp_b
    # Cap at 64 MiB so the same setting is valid on v7x (64 MiB physical/TC).
    vmem_limit = min(max(2 * footprint + (2 << 20), 16 << 20), 64 << 20)

    kernel = functools.partial(_dense_kernel, d_pad=d_pad)

    out_p = pl.pallas_call(
        kernel,
        out_shape=jax.ShapeDtypeStruct((b_pad, d_pad), jnp.float32),
        grid_spec=pltpu.PrefetchScalarGridSpec(
            num_scalar_prefetch=0,
            grid=(n_btiles, n_layers),
            in_specs=[
                # x: constant block index along the layer axis -> fetched once
                # per batch tile, not re-DMA'd per layer.
                pl.BlockSpec((tb, d_pad), lambda b, l: (b, 0)),
                # streamed layer weights / biases (double-buffered by Pallas).
                pl.BlockSpec((1, d_pad, two_d), lambda b, l: (l, 0, 0)),
                pl.BlockSpec((1, 1, two_d), lambda b, l: (l, 0, 0)),
            ],
            out_specs=pl.BlockSpec((tb, d_pad), lambda b, l: (b, 0)),
            scratch_shapes=[pltpu.VMEM((tb, d_pad), jnp.float32)],
        ),
        compiler_params=pltpu.CompilerParams(
            dimension_semantics=("parallel", "arbitrary"),
            vmem_limit_bytes=int(vmem_limit),
        ),
        cost_estimate=pl.CostEstimate(
            flops=int(flops),
            transcendentals=int(transcendentals),
            bytes_accessed=int(bytes_accessed),
        ),
    )(x_p, wc_stack, bc_stack)

    return out_p[:B, :fout_last]


# ---------------------------------------------------------------------------
# References for correctness checking.
# ---------------------------------------------------------------------------
def dense_forward_ref_f32(x, params):
    """Pure-f32 reference (matches the PyTorch module semantics)."""
    for (w, b, wg, bg) in params:
        v1 = x @ w + b
        gate = jax.nn.sigmoid(x @ wg + bg)
        x = v1 * gate
    return x


def dense_forward_ref_bf16(x, params):
    """Reference matching the kernel's numerics (bf16 dot inputs, f32 acc)."""
    for (w, b, wg, bg) in params:
        v1 = jnp.dot(x.astype(jnp.bfloat16), w.astype(jnp.bfloat16),
                     preferred_element_type=jnp.float32) + b
        g = jnp.dot(x.astype(jnp.bfloat16), wg.astype(jnp.bfloat16),
                    preferred_element_type=jnp.float32) + bg
        x = v1 * jax.nn.sigmoid(g)
    return x


if __name__ == "__main__":
    # Small shapes consistent with the module: batch=8, input_size=32,
    # output_size=16, n_layers=2 (layer sizes 32->22->16 per the schedule).
    batch = 8
    input_size = 32
    output_size = 16
    n_layers = 2

    key = jax.random.PRNGKey(0)
    key, xkey = jax.random.split(key)
    x = jax.random.normal(xkey, (batch, input_size), jnp.float32)

    params = make_dense_params(key, input_size, output_size, n_layers)

    # Pre-pack ONCE (setup time), reuse across calls.
    packed = pack_dense_params(params)
    packed = jax.tree_util.tree_map(
        lambda a: jax.block_until_ready(a) if isinstance(a, jax.Array) else a,
        packed)

    out = dense_forward(x, packed)
    out = jax.block_until_ready(out)

    ref_exact = dense_forward_ref_bf16(x, params)   # same numerics as kernel
    ref_f32 = dense_forward_ref_f32(x, params)      # module-semantics check

    assert out.shape == (batch, output_size)
    assert jnp.allclose(out, ref_exact, atol=1e-4, rtol=1e-4), (
        "mismatch vs bf16-matched reference")
    assert jnp.allclose(out, ref_f32, atol=5e-2, rtol=5e-2), (
        "mismatch vs f32 reference beyond bf16 tolerance")

    print("KERNEL_OK")
</pallas_src>

<mosaic_0001>
module attributes {stable_mosaic.version = 11 : i64} {
  func.func @_dense_kernel(%arg0: i32, %arg1: i32, %arg2: memref<16x128xf32, #tpu.memory_space<vmem>>, %arg3: memref<1x128x256xbf16, #tpu.memory_space<vmem>>, %arg4: memref<1x1x256xf32, #tpu.memory_space<vmem>>, %arg5: memref<16x128xf32, #tpu.memory_space<vmem>>, %arg6: memref<16x128xf32, #tpu.memory_space<vmem>>) attributes {dimension_semantics = [#tpu.dimension_semantics<parallel>, #tpu.dimension_semantics<arbitrary>], iteration_bounds = array<i64: 1, 2>, scalar_prefetch = 0 : i64, scratch_operands = 1 : i64, tpu.core_type = #tpu.core_type<tc>, window_params = [{transform_indices = @transform_0, window_bounds = array<i64: 16, 128>}, {transform_indices = @transform_1, window_bounds = array<i64: 1, 128, 256>}, {transform_indices = @transform_2, window_bounds = array<i64: 1, 1, 256>}, {transform_indices = @transform_3, window_bounds = array<i64: 16, 128>}]} {
    %c0_i32 = arith.constant 0 : i32
    %0 = arith.cmpi eq, %arg1, %c0_i32 : i32
    %1 = arith.extui %0 : i1 to i32
    %c0_i32_0 = arith.constant 0 : i32
    %2 = arith.cmpi ne, %1, %c0_i32_0 : i32
    scf.if %2 {
      %c0_12 = arith.constant 0 : index
      %c0_13 = arith.constant 0 : index
      %24 = vector.load %arg2[%c0_12, %c0_13] : memref<16x128xf32, #tpu.memory_space<vmem>>, vector<16x128xf32>
      %c0_14 = arith.constant 0 : index
      %c0_15 = arith.constant 0 : index
      %25 = vector.load %arg6[%c0_14, %c0_15] : memref<16x128xf32, #tpu.memory_space<vmem>>, vector<16x128xf32>
      tpu.vector_store %arg6[%c0_14, %c0_15], %24 {strides = array<i32>} : memref<16x128xf32, #tpu.memory_space<vmem>>, vector<16x128xf32>,
    } else {
    }
    %c0 = arith.constant 0 : index
    %c0_1 = arith.constant 0 : index
    %3 = vector.load %arg6[%c0, %c0_1] : memref<16x128xf32, #tpu.memory_space<vmem>>, vector<16x128xf32>
    %4 = arith.truncf %3 : vector<16x128xf32> to vector<16x128xbf16>
    %c0_2 = arith.constant 0 : index
    %c0_3 = arith.constant 0 : index
    %c0_4 = arith.constant 0 : index
    %5 = vector.load %arg3[%c0_2, %c0_3, %c0_4] : memref<1x128x256xbf16, #tpu.memory_space<vmem>>, vector<1x128x256xbf16>
    %6 = vector.shape_cast %5 : vector<1x128x256xbf16> to vector<128x256xbf16>
    %cst = arith.constant dense<0.000000e+00> : vector<16x256xf32>
    %7 = tpu.matmul %4, %6, %cst {dimension_numbers = #tpu.dot_dimension_numbers<[1], [0], [0], [1], [0, 0, 1, 1], [], []>} : vector<16x128xbf16>, vector<128x256xbf16>, vector<16x256xf32> -> vector<16x256xf32>
    %c0_5 = arith.constant 0 : index
    %c0_6 = arith.constant 0 : index
    %c0_7 = arith.constant 0 : index
    %8 = vector.load %arg4[%c0_5, %c0_6, %c0_7] : memref<1x1x256xf32, #tpu.memory_space<vmem>>, vector<1x1x256xf32>
    %9 = vector.shape_cast %8 : vector<1x1x256xf32> to vector<1x256xf32>
    %10 = vector.broadcast %9 : vector<1x256xf32> to vector<16x256xf32>
    %11 = arith.addf %7, %10 : vector<16x256xf32>
    %12 = vector.extract_strided_slice %11 {offsets = [0, 0], sizes = [16, 128], strides = [1, 1]} : vector<16x256xf32> to vector<16x128xf32>
    %13 = vector.extract_strided_slice %11 {offsets = [0, 128], sizes = [16, 128], strides = [1, 1]} : vector<16x256xf32> to vector<16x128xf32>
    %14 = arith.negf %13 : vector<16x128xf32>
    %15 = math.exp %14 : vector<16x128xf32>
    %cst_8 = arith.constant 1.000000e+00 : f32
    %16 = vector.broadcast %cst_8 : f32 to vector<16x128xf32>
    %17 = arith.addf %16, %15 : vector<16x128xf32>
    %18 = arith.divf %16, %17 : vector<16x128xf32>
    %19 = arith.mulf %12, %18 : vector<16x128xf32>
    %c0_9 = arith.constant 0 : index
    %c0_10 = arith.constant 0 : index
    %20 = vector.load %arg6[%c0_9, %c0_10] : memref<16x128xf32, #tpu.memory_space<vmem>>, vector<16x128xf32>
    tpu.vector_store %arg6[%c0_9, %c0_10], %19 {strides = array<i32>} : memref<16x128xf32, #tpu.memory_space<vmem>>, vector<16x128xf32>,
    %c1_i32 = arith.constant 1 : i32
    %21 = arith.cmpi eq, %arg1, %c1_i32 : i32
    %22 = arith.extui %21 : i1 to i32
    %c0_i32_11 = arith.constant 0 : i32
    %23 = arith.cmpi ne, %22, %c0_i32_11 : i32
    scf.if %23 {
      %c0_12 = arith.constant 0 : index
      %c0_13 = arith.constant 0 : index
      %24 = vector.load %arg6[%c0_12, %c0_13] : memref<16x128xf32, #tpu.memory_space<vmem>>, vector<16x128xf32>
      %c0_14 = arith.constant 0 : index
      %c0_15 = arith.constant 0 : index
      %25 = vector.load %arg5[%c0_14, %c0_15] : memref<16x128xf32, #tpu.memory_space<vmem>>, vector<16x128xf32>
      tpu.vector_store %arg5[%c0_14, %c0_15], %24 {strides = array<i32>} : memref<16x128xf32, #tpu.memory_space<vmem>>, vector<16x128xf32>,
    } else {
    }
    return
  }
  func.func @transform_0(%arg0: i32, %arg1: i32) -> (i32, i32) {
    %c0_i32 = arith.constant 0 : i32
    %c0_i32_0 = arith.constant 0 : i32
    return %arg0, %c0_i32 : i32, i32
  }
  func.func @transform_1(%arg0: i32, %arg1: i32) -> (i32, i32, i32) {
    %c0_i32 = arith.constant 0 : i32
    %c0_i32_0 = arith.constant 0 : i32
    %c0_i32_1 = arith.constant 0 : i32
    return %arg1, %c0_i32, %c0_i32_0 : i32, i32, i32
  }
  func.func @transform_2(%arg0: i32, %arg1: i32) -> (i32, i32, i32) {
    %c0_i32 = arith.constant 0 : i32
    %c0_i32_0 = arith.constant 0 : i32
    %c0_i32_1 = arith.constant 0 : i32
    return %arg1, %c0_i32, %c0_i32_0 : i32, i32, i32
  }
  func.func @transform_3(%arg0: i32, %arg1: i32) -> (i32, i32) {
    %c0_i32 = arith.constant 0 : i32
    %c0_i32_0 = arith.constant 0 : i32
    return %arg0, %c0_i32 : i32, i32
  }
}

</mosaic_0001>

<llo_original>
// kernel: tpu_custom_call.1
$region0: #{tpu_custom_call.1}
  #allocation0 [shape = 'u32[]', space=smem, size = 0x4, offset = 0x4, fixed_abs, tag = 'smem constant byte address 0x4 - core index']
  #allocation1 [shape = 'u32[144,128]{1,0:T(1,128)}', space=vmem, size = 0x12000, scoped, tag = 'internal scratch']
  #allocation2 [shape = 'f32[16,128]{1,0:T(8,128)}', space=vmem, size = 0x2000, scoped, tag = 'scratch operand']
  %s0 = inlined_call_operand.hbm [shape: f32[16,128], index: 0, kind: input, shape index: {}]
  %s1 = inlined_call_operand.hbm [shape: bf16[2,128,256], index: 1, kind: input, shape index: {}]
  %s2 = inlined_call_operand.vmem [shape: f32[2,1,256], index: 2, kind: input, shape index: {}]
  %s3 = inlined_call_operand.hbm [shape: f32[16,128], index: 3, kind: output, shape index: {}]
  %s4 = sld [smem:[#allocation0]]
  $region61: #{tpu_custom_call.1} parent=0
    _
  %s6 = ssub.s32 1, %s4
  %s7 = scalar_select 0, %s6, %s4
  $region1: #{tpu_custom_call.1} parent=0
    #allocation3 [shape = 'u8[8192]{0}', space=vmem, size = 0x2000, scoped, tag = 'input window, operand 0, single buffered']
    #allocation4 [shape = 's32[2]{0}', space=sflag, size = 0x8, scoped, tag = 'scoped memory for tpu_custom_call.1']
    #allocation5 [shape = 's32[2]{0}', space=sflag, size = 0x8, scoped, tag = 'scoped memory for tpu_custom_call.1']
    #allocation6 [shape = 'u8[131072]{0}', space=vmem, size = 0x20000, scoped, tag = 'input window, operand 1']
    #allocation7 [shape = 's32[2]{0}', space=sflag, size = 0x8, scoped, tag = 'scoped memory for tpu_custom_call.1']
    #allocation8 [shape = 'u8[8192]{0}', space=vmem, size = 0x2000, scoped, tag = 'output window, operand 0, single buffered']
    %8 = vsyncpa [#allocation4], 0
    %9 = vsyncpa [#allocation7], 0
    %s10 = scalar_lea.sflag [#allocation7], 1
    %11 = vsyncpa %s10, 0
    %12 = vsyncpa [#allocation5], 0
    loop: start=0, step=1, limit=4
    $region2: #{tpu_custom_call.1} parent=1 // loop_pre_header
      _
    $region3: #{tpu_custom_call.1} parent=1 // loop_header
      %s14 = sphi 0, %s18
      %p15 = scmp.ge.s32.totalorder %s14, 4
      %s21 = sphi 0, %s33
      %s22 = sphi 0, %s29
      %s23 = sphi 0, %s21
      %s24 = sphi 0, %s22
      %s25 = sphi 0, %s23
      %s26 = sphi 0, %s24
      %s36 = sphi 0, %s38
      %s39 = sphi 0, %s36
      %s40 = sphi 0, %s39
      %s56 = sphi 0, %s40
      %s62 = sphi 0, %s64
      %s65 = sphi 0, %s62
      %s66 = sphi 0, %s65
      %s82 = sphi 0, %s66
      %s88 = sphi 0, %s90
      %s91 = sphi 0, %s88
      %s92 = sphi 0, %s91
      %s108 = sphi 0, %s92
      %s114 = sphi 0, %s116
      %s117 = sphi 0, %s114
      %s118 = sphi 0, %s117
      %s134 = sphi 0, %s118
    $region4: #{tpu_custom_call.1} parent=1 // loop_header_branch
      %17 = sbr.rel (%p15) target = $region8
    $region5: #{tpu_custom_call.1} parent=1 // loop_body
      %s19 = ssub.s32 %s14, 1
      %s20 = ssub.s32 %s14, 2
      %s27 = sadd.s32 1, %s22
      %p28 = scmp.ge.s32.totalorder %s27, 2
      %s29 = scalar_select %p28, 0, %s27
      %s30 = sadd.s32 1, %s21
      %s31 = scalar_select %p28, %s30, %s21
      %p32 = scmp.ge.s32.totalorder %s31, 1
      %s33 = scalar_select %p32, 0, %s31
      %s34 = ssub.s32 %s21, %s33
      %p35 = scmp.eq.s32.totalorder %s34, 0
      %s37 = sadd.s32 %s36, 1
      %s38 = scalar_select %p35, %s36, %s37
      %p41 = pneg %p35
      %p42 = scmp.eq.s32.totalorder %s14, 1
      %p43 = por %p41, %p42
      %p44 = scmp.ne.s32.totalorder %s36, %s39
      %p45 = scmp.eq.s32.totalorder %s14, 0
      %p46 = por %p44, %p45
      %p47 = scmp.ne.s32.totalorder %s36, %s39
      %p48 = scmp.eq.s32.totalorder %s19, 1
      %p49 = por %p47, %p48
      %p50 = scmp.ne.s32.totalorder %s39, %s40
      %p51 = scmp.eq.s32.totalorder %s19, 0
      %p52 = por %p50, %p51
      %p53 = scmp.ne.s32.totalorder %s39, %s40
      %p54 = scmp.eq.s32.totalorder %s20, 1
      %p55 = por %p53, %p54
      %p57 = scmp.ne.s32.totalorder %s40, %s56
      %p58 = scmp.eq.s32.totalorder %s20, 0
      %p59 = por %p57, %p58
      %s60 = ssub.s32 %s22, %s29
      %p61 = scmp.eq.s32.totalorder %s60, 0
      %s63 = sadd.s32 %s62, 1
      %s64 = scalar_select %p61, %s62, %s63
      %p67 = pneg %p61
      %p68 = scmp.eq.s32.totalorder %s14, 1
      %p69 = por %p67, %p68
      %p70 = scmp.ne.s32.totalorder %s62, %s65
      %p71 = scmp.eq.s32.totalorder %s14, 0
      %p72 = por %p70, %p71
      %p73 = scmp.ne.s32.totalorder %s62, %s65
      %p74 = scmp.eq.s32.totalorder %s19, 1
      %p75 = por %p73, %p74
      %p76 = scmp.ne.s32.totalorder %s65, %s66
      %p77 = scmp.eq.s32.totalorder %s19, 0
      %p78 = por %p76, %p77
      %p79 = scmp.ne.s32.totalorder %s65, %s66
      %p80 = scmp.eq.s32.totalorder %s20, 1
      %p81 = por %p79, %p80
      %p83 = scmp.ne.s32.totalorder %s66, %s82
      %p84 = scmp.eq.s32.totalorder %s20, 0
      %p85 = por %p83, %p84
      %s86 = ssub.s32 %s22, %s29
      %p87 = scmp.eq.s32.totalorder %s86, 0
      %s89 = sadd.s32 %s88, 1
      %s90 = scalar_select %p87, %s88, %s89
      %p93 = pneg %p87
      %p94 = scmp.eq.s32.totalorder %s14, 1
      %p95 = por %p93, %p94
      %p96 = scmp.ne.s32.totalorder %s88, %s91
      %p97 = scmp.eq.s32.totalorder %s14, 0
      %p98 = por %p96, %p97
      %p99 = scmp.ne.s32.totalorder %s88, %s91
      %p100 = scmp.eq.s32.totalorder %s19, 1
      %p101 = por %p99, %p100
      %p102 = scmp.ne.s32.totalorder %s91, %s92
      %p103 = scmp.eq.s32.totalorder %s19, 0
      %p104 = por %p102, %p103
      %p105 = scmp.ne.s32.totalorder %s91, %s92
      %p106 = scmp.eq.s32.totalorder %s20, 1
      %p107 = por %p105, %p106
      %p109 = scmp.ne.s32.totalorder %s92, %s108
      %p110 = scmp.eq.s32.totalorder %s20, 0
      %p111 = por %p109, %p110
      %s112 = ssub.s32 %s21, %s33
      %p113 = scmp.eq.s32.totalorder %s112, 0
      %s115 = sadd.s32 %s114, 1
      %s116 = scalar_select %p113, %s114, %s115
      %p119 = pneg %p113
      %p120 = scmp.eq.s32.totalorder %s14, 1
      %p121 = por %p119, %p120
      %p122 = scmp.ne.s32.totalorder %s114, %s117
      %p123 = scmp.eq.s32.totalorder %s14, 0
      %p124 = por %p122, %p123
      %p125 = scmp.ne.s32.totalorder %s114, %s117
      %p126 = scmp.eq.s32.totalorder %s19, 1
      %p127 = por %p125, %p126
      %p128 = scmp.ne.s32.totalorder %s117, %s118
      %p129 = scmp.eq.s32.totalorder %s19, 0
      %p130 = por %p128, %p129
      %p131 = scmp.ne.s32.totalorder %s117, %s118
      %p132 = scmp.eq.s32.totalorder %s20, 1
      %p133 = por %p131, %p132
      %p135 = scmp.ne.s32.totalorder %s118, %s134
      %p136 = scmp.eq.s32.totalorder %s20, 0
      %p137 = por %p135, %p136
      %p138 = scmp.le.s32.totalorder 1, %s14
      %p139 = scmp.lt.s32.totalorder %s14, 3
      %p140 = pnand %p138, %p139
      %p141 = pneg %p140
      // Predicated region
      $region9: #{tpu_custom_call.1} parent=5 // pred_check
        _
      $region10: #{tpu_custom_call.1} parent=5 // pred_check_branch
        %143 = sbr.rel (%p140) target = $region12
      $region11: #{tpu_custom_call.1} parent=5 // pred_region
        %s144 = ssub.s32 %s14, 1
        // Predicated region
        $region13: #{tpu_custom_call.1} parent=11 // pred_check
          %p145 = pneg %p52
        $region14: #{tpu_custom_call.1} parent=11 // pred_check_branch
          %147 = sbr.rel (%p145) target = $region16
        $region15: #{tpu_custom_call.1} parent=11 // pred_region
          %s148 = smul.u32 2, %s23
          %s150 = ssub.s32 256, 256
          %151 = vsyncadd [#allocation4], %s150
          %s152 = smul.addr %s148, 128
          %s153 = scalar_lea.hbm %s0, %s152
          %s154 = sshll.u32 [#allocation3], 4
          %s155 = int_to_ptr.vmem [resolvable:$true] %s154
          %160 = dma.hbm_to_vmem [thread:$0]  %s153, 256, %s155, [#allocation4], 128, 128, 8
        $region16: #{tpu_custom_call.1} parent=11 // pred_fallthru
          _
      $region12: #{tpu_custom_call.1} parent=5 // pred_fallthru
        _
      %p161 = scmp.lt.s32.totalorder %s14, 2
      // Predicated region
      $region17: #{tpu_custom_call.1} parent=5 // pred_check
        %p162 = pneg %p161
      $region18: #{tpu_custom_call.1} parent=5 // pred_check_branch
        %164 = sbr.rel (%p162) target = $region20
      $region19: #{tpu_custom_call.1} parent=5 // pred_region
        // Predicated region
        $region21: #{tpu_custom_call.1} parent=19 // pred_check
          %p165 = pneg %p72
        $region22: #{tpu_custom_call.1} parent=19 // pred_check_branch
          %167 = sbr.rel (%p165) target = $region24
        $region23: #{tpu_custom_call.1} parent=19 // pred_region
          %s168 = sand.u32 %s62, 1
          %s169 = scalar_lea.sflag [#allocation7], %s168
          %s170 = sand.u32 %s62, 1
          %s171 = smul.addr %s170, 128
          %s172 = scalar_lea.vmem [#allocation6], %s171
          %s174 = ssub.s32 2048, 2048
          %175 = vsyncadd %s169, %s174
          %s176 = smul.addr %s22, 32
          %s177 = smul.addr %s176, 64
          %s178 = scalar_lea.hbm %s1, %s177
          %s179 = sshll.u32 %s172, 4
          %s180 = int_to_ptr.vmem [resolvable:$true] %s179
          %185 = dma.hbm_to_vmem [thread:$0]  %s178, 2048, %s180, %s169, 128, 128, 8
        $region24: #{tpu_custom_call.1} parent=19 // pred_fallthru
          _
        // Predicated region
        $region25: #{tpu_custom_call.1} parent=19 // pred_check
          %p186 = pneg %p98
        $region26: #{tpu_custom_call.1} parent=19 // pred_check_branch
          %188 = sbr.rel (%p186) target = $region28
        $region27: #{tpu_custom_call.1} parent=19 // pred_region
          %p189 = scmp.lt.s32.totalorder %s22, 1
          %s190 = scalar_select %p189, %s22, 1
          %s191 = smul.addr %s190, 2
          %s192 = scalar_lea.vmem %s2, %s191
        $region28: #{tpu_custom_call.1} parent=19 // pred_fallthru
          _
      $region20: #{tpu_custom_call.1} parent=5 // pred_fallthru
        _
      %p193 = scmp.le.s32.totalorder 1, %s14
      %p194 = scmp.lt.s32.totalorder %s14, 3
      %p195 = pnand %p193, %p194
      %p196 = pneg %p195
      // Predicated region
      $region29: #{tpu_custom_call.1} parent=5 // pred_check
        _
      $region30: #{tpu_custom_call.1} parent=5 // pred_check_branch
        %198 = sbr.rel (%p195) target = $region32
      $region31: #{tpu_custom_call.1} parent=5 // pred_region
        %s199 = ssub.s32 %s14, 1
        // Predicated region
        $region33: #{tpu_custom_call.1} parent=31 // pred_check
          %p200 = pneg %p52
        $region34: #{tpu_custom_call.1} parent=31 // pred_check_branch
          %202 = sbr.rel (%p200) target = $region36
        $region35: #{tpu_custom_call.1} parent=31 // pred_region
          %203 = dma.done [#allocation4], 256
        $region36: #{tpu_custom_call.1} parent=31 // pred_fallthru
          _
        %s204 = sand.u32 %s65, 1
        %s205 = scalar_lea.sflag [#allocation7], %s204
        %s206 = sand.u32 %s65, 1
        %s207 = smul.addr %s206, 128
        %s208 = scalar_lea.vmem [#allocation6], %s207
        // Predicated region
        $region37: #{tpu_custom_call.1} parent=31 // pred_check
          %p209 = pneg %p78
        $region38: #{tpu_custom_call.1} parent=31 // pred_check_branch
          %211 = sbr.rel (%p209) target = $region40
        $region39: #{tpu_custom_call.1} parent=31 // pred_region
          %212 = dma.done %s205, 2048
        $region40: #{tpu_custom_call.1} parent=31 // pred_fallthru
          _
        %p213 = pneg %p52
        %p214 = pneg %p49
        %s215 = sand.u32 %s65, 1
        %s216 = scalar_lea.sflag [#allocation7], %s215
        %s217 = sand.u32 %s65, 1
        %s218 = smul.addr %s217, 128
        %s219 = scalar_lea.vmem [#allocation6], %s218
        %p220 = pneg %p78
        %p221 = pneg %p75
        %p222 = scmp.lt.s32.totalorder %s24, 1
        %s223 = scalar_select %p222, %s24, 1
        %s224 = smul.addr %s223, 2
        %s225 = scalar_lea.vmem %s2, %s224
        %p226 = pneg %p104
        %p227 = pneg %p101
        %p228 = pneg %p130
        %p229 = pneg %p127
        %s230 = smul.u32 2, %s23
        %p231 = scmp.lt.s32.totalorder %s24, 1
        %s232 = scalar_select %p231, %s24, 1
        %s233 = smul.addr %s232, 2
        %s234 = scalar_lea.vmem %s2, %s233
        %s235 = smul.u32 2, %s23
        %p237 = scmp.eq.s32.totalorder %s24, 0
        // Predicated region
        $region41: #{tpu_custom_call.1} parent=31 // pred_check
          %p238 = pneg %p237
        $region42: #{tpu_custom_call.1} parent=31 // pred_check_branch
          %240 = sbr.rel (%p238) target = $region44
        $region43: #{tpu_custom_call.1} parent=31 // pred_region
          %v241 = vld [vmem:[#allocation3] sm:$0xff]
          %v242 = vld [vmem:[#allocation3 + $0x8] sm:$0xff]
          %243 = vst [vmem:[#allocation2] sm:$0xff] %v241
          %244 = vst [vmem:[#allocation2 + $0x8] sm:$0xff] %v242
        $region44: #{tpu_custom_call.1} parent=31 // pred_fallthru
          _
        %v245 = vld [vmem:[#allocation2] sm:$0xff]
        %v246 = vld [vmem:[#allocation2 + $0x8] sm:$0xff]
        %v247 = vpack.c.bf16 %v246, %v245
        %v248 = vld [vmem:[%s208] sm:$0xff]
        %v249 = vld [vmem:[%s208 + $0x8] sm:$0xff]
        %v250 = vld [vmem:[%s208 + $0x10] sm:$0xff]
        %v251 = vld [vmem:[%s208 + $0x18] sm:$0xff]
        %v252 = vld [vmem:[%s208 + $0x20] sm:$0xff]
        %v253 = vld [vmem:[%s208 + $0x28] sm:$0xff]
        %v254 = vld [vmem:[%s208 + $0x30] sm:$0xff]
        %v255 = vld [vmem:[%s208 + $0x38] sm:$0xff]
        %v256 = vld [vmem:[%s208 + $0x40] sm:$0xff]
        %v257 = vld [vmem:[%s208 + $0x48] sm:$0xff]
        %v258 = vld [vmem:[%s208 + $0x50] sm:$0xff]
        %v259 = vld [vmem:[%s208 + $0x58] sm:$0xff]
        %v260 = vld [vmem:[%s208 + $0x60] sm:$0xff]
        %v261 = vld [vmem:[%s208 + $0x68] sm:$0xff]
        %v262 = vld [vmem:[%s208 + $0x70] sm:$0xff]
        %v263 = vld [vmem:[%s208 + $0x78] sm:$0xff]
        %v264 = vld [vmem:[%s234] sm:$0x3]
        %v266 = vlaneseq
        %v267 = vshrl.u32 %v266, 7
        %v268 = vsub.s32 0, %v267
        %v269 = vrot.slane %v264, %v268
        %v270 = vlaneseq
        %v271 = vshrl.u32 %v270, 7
        %v272 = vsub.s32 1, %v271
        %v273 = vrot.slane %v264, %v272
        %v292 = vunpack.c.l.b16 %v248
        %v293 = vunpack.c.h.b16 %v248
        %v294 = vunpack.c.l.b16 %v249
        %v295 = vunpack.c.h.b16 %v249
        %v296 = vunpack.c.l.b16 %v250
        %v297 = vunpack.c.h.b16 %v250
        %v298 = vunpack.c.l.b16 %v251
        %v299 = vunpack.c.h.b16 %v251
        %v300 = vunpack.c.l.b16 %v252
        %v301 = vunpack.c.h.b16 %v252
        %v302 = vunpack.c.l.b16 %v253
        %v303 = vunpack.c.h.b16 %v253
        %v304 = vunpack.c.l.b16 %v254
        %v305 = vunpack.c.h.b16 %v254
        %v306 = vunpack.c.l.b16 %v255
        %v307 = vunpack.c.h.b16 %v255
        %v308 = vunpack.c.l.b16 %v256
        %v309 = vunpack.c.h.b16 %v256
        %v310 = vunpack.c.l.b16 %v257
        %v311 = vunpack.c.h.b16 %v257
        %v312 = vunpack.c.l.b16 %v258
        %v313 = vunpack.c.h.b16 %v258
        %v314 = vunpack.c.l.b16 %v259
        %v315 = vunpack.c.h.b16 %v259
        %v316 = vunpack.c.l.b16 %v260
        %v317 = vunpack.c.h.b16 %v260
        %v318 = vunpack.c.l.b16 %v261
        %v319 = vunpack.c.h.b16 %v261
        %v320 = vunpack.c.l.b16 %v262
        %v321 = vunpack.c.h.b16 %v262
        %v322 = vunpack.c.l.b16 %v263
        %v323 = vunpack.c.h.b16 %v263
        %v324 = vpack.c.b16 %v294, %v292
        %v325 = vpack.c.b16 %v295, %v293
        %v326 = vpack.c.b16 %v298, %v296
        %v327 = vpack.c.b16 %v299, %v297
        %v328 = vpack.c.b16 %v302, %v300
        %v329 = vpack.c.b16 %v303, %v301
        %v330 = vpack.c.b16 %v306, %v304
        %v331 = vpack.c.b16 %v307, %v305
        %v332 = vpack.c.b16 %v310, %v308
        %v333 = vpack.c.b16 %v311, %v309
        %v334 = vpack.c.b16 %v314, %v312
        %v335 = vpack.c.b16 %v315, %v313
        %v336 = vpack.c.b16 %v318, %v316
        %v337 = vpack.c.b16 %v319, %v317
        %v338 = vpack.c.b16 %v322, %v320
        %v339 = vpack.c.b16 %v323, %v321
        %356 = vmatprep.subr.bf16.mxu0 %v325
        %357 = vmatpush1.bf16.msra.mxu0 %v324
        %358 = vmatprep.subr.bf16.mxu0 %v327
        %359 = vmatpush1.bf16.msra.mxu0 %v326
        %360 = vmatprep.subr.bf16.mxu0 %v329
        %361 = vmatpush1.bf16.msra.mxu0 %v328
        %362 = vmatprep.subr.bf16.mxu0 %v331
        %363 = vmatpush1.bf16.msra.mxu0 %v330
        %364 = vmatprep.subr.bf16.mxu0 %v333
        %365 = vmatpush1.bf16.msra.mxu0 %v332
        %366 = vmatprep.subr.bf16.mxu0 %v335
        %367 = vmatpush1.bf16.msra.mxu0 %v334
        %368 = vmatprep.subr.bf16.mxu0 %v337
        %369 = vmatpush1.bf16.msra.mxu0 %v336
        %370 = vmatprep.subr.bf16.mxu0 %v339
        %371 = vmatpush1.bf16.msra.mxu0 %v338
        %372 = vmatprep.subr.bf16.mxu0 0
        %373 = vmatpush1.bf16.msra.mxu0 0
        %374 = vmatprep.subr.bf16.mxu0 0
        %375 = vmatpush1.bf16.msra.mxu0 0
        %376 = vmatprep.subr.bf16.mxu0 0
        %377 = vmatpush1.bf16.msra.mxu0 0
        %378 = vmatprep.subr.bf16.mxu0 0
        %379 = vmatpush1.bf16.msra.mxu0 0
        %380 = vmatprep.subr.bf16.mxu0 0
        %381 = vmatpush1.bf16.msra.mxu0 0
        %382 = vmatprep.subr.bf16.mxu0 0
        %383 = vmatpush1.bf16.msra.mxu0 0
        %384 = vmatprep.subr.bf16.mxu0 0
        %385 = vmatpush1.bf16.msra.mxu0 0
        %386 = vmatprep.subr.bf16.mxu0 0
        %387 = vmatpush1.bf16.msra.mxu0 0
        %388 = vmatprep.mubr.bf16.mxu0 0
        %389 = vmatmul.mubr.bf16.gmra.mrb[0].mxu0 %v247
        %v390 = vpop.f32.mrb[0].mxu0
        %v391 = vadd.f32 %v269, %v390
        %v392 = vpop.f32.mrb[0].mxu0
        %v393 = vadd.f32 %v273, %v392
        %v394 = vpop.f32.mrb[0].mxu0
        %v395 = vadd.f32 %v269, %v394
        %v396 = vpop.f32.mrb[0].mxu0
        %v397 = vadd.f32 %v273, %v396
        %398 = vdwg.mxu0
        %v399 = vxor.u32 %v393, 2147483648
        %v400 = vxor.u32 %v397, 2147483648
        %v401 = vmul.f32 %v399, 1.442695
        %v402 = vpow.pop %v401
        %v403 = vmul.f32 %v400, 1.442695
        %v404 = vpow.pop %v403
        %v405 = vadd.f32 %v402, 1.0
        %v406 = vadd.f32 %v404, 1.0
        %v407 = vrcp.pop %v405
        %v408 = vmul.f32 1.0, %v407
        %v409 = vrcp.pop %v406
        %v410 = vmul.f32 1.0, %v409
        %v411 = vmul.f32 %v391, %v408
        %v412 = vmul.f32 %v395, %v410
        %413 = vst [vmem:[#allocation2] sm:$0xff] %v411
        %414 = vst [vmem:[#allocation2 + $0x8] sm:$0xff] %v412
        %p415 = scmp.eq.s32.totalorder %s24, 1
        // Predicated region
        $region45: #{tpu_custom_call.1} parent=31 // pred_check
          %p416 = pneg %p415
        $region46: #{tpu_custom_call.1} parent=31 // pred_check_branch
          %418 = sbr.rel (%p416) target = $region48
        $region47: #{tpu_custom_call.1} parent=31 // pred_region
          %v419 = vld [vmem:[#allocation2] sm:$0xff]
          %v420 = vld [vmem:[#allocation2 + $0x8] sm:$0xff]
          %421 = vst [vmem:[#allocation8] sm:$0xff] %v419
          %422 = vst [vmem:[#allocation8 + $0x8] sm:$0xff] %v420
        $region48: #{tpu_custom_call.1} parent=31 // pred_fallthru
          _
        // Predicated region
        $region49: #{tpu_custom_call.1} parent=31 // pred_check
          %p423 = pneg %p127
        $region50: #{tpu_custom_call.1} parent=31 // pred_check_branch
          %425 = sbr.rel (%p423) target = $region52
        $region51: #{tpu_custom_call.1} parent=31 // pred_region
          %s426 = smul.u32 2, %s23
          %s428 = ssub.s32 256, 256
          %429 = vsyncadd [#allocation5], %s428
          %s430 = smul.addr %s426, 128
          %s431 = scalar_lea.hbm %s3, %s430
          %s432 = sshll.u32 [#allocation8], 4
          %s433 = int_to_ptr.vmem [resolvable:$true] %s432
          %438 = dma.vmem_to_hbm [thread:$0]  %s433, 256, %s431, [#allocation5], 128, 128, 8
        $region52: #{tpu_custom_call.1} parent=31 // pred_fallthru
          _
        // Predicated region
        $region53: #{tpu_custom_call.1} parent=31 // pred_check
          %p439 = pneg %p127
        $region54: #{tpu_custom_call.1} parent=31 // pred_check_branch
          %441 = sbr.rel (%p439) target = $region56
        $region55: #{tpu_custom_call.1} parent=31 // pred_region
          %442 = dma.done [#allocation5], 256
        $region56: #{tpu_custom_call.1} parent=31 // pred_fallthru
          _
      $region32: #{tpu_custom_call.1} parent=5 // pred_fallthru
        _
      %p443 = scmp.le.s32.totalorder 2, %s14
      // Predicated region
      $region57: #{tpu_custom_call.1} parent=5 // pred_check
        %p444 = pneg %p443
      $region58: #{tpu_custom_call.1} parent=5 // pred_check_branch
        %446 = sbr.rel (%p444) target = $region60
      $region59: #{tpu_custom_call.1} parent=5 // pred_region
        %s447 = ssub.s32 %s14, 2
      $region60: #{tpu_custom_call.1} parent=5 // pred_fallthru
        _
    $region6: #{tpu_custom_call.1} parent=1 // loop_footer
      %s18 = sadd.s32 1, %s14
    $region7: #{tpu_custom_call.1} parent=1 // loop_footer_branch
      %13 = sbr.rel target = $region3
    $region8: #{tpu_custom_call.1} parent=1 // loop_exit
      _
    %448 = vsyncpa [#allocation4], 1
    %s449 = scalar_lea.sflag [#allocation4], 1
    %450 = vsyncpa %s449, 1
    %451 = vsyncpa [#allocation7], 1
    %s452 = scalar_lea.sflag [#allocation7], 1
    %453 = vsyncpa %s452, 1
    %454 = vsyncpa [#allocation5], 1
    %s455 = scalar_lea.sflag [#allocation5], 1
    %456 = vsyncpa %s455, 1

</llo_original>
